<compile_context>
chip_gen: v7x
topology: tpu7x:2x2x1
jax: 0.10.0
libtpu: 0.0.40
codegen_flags: <defaults>
</compile_context>

<pallas_src>
import functools

import jax
import jax.numpy as jnp
from jax.experimental import pallas as pl
from jax.experimental.pallas import tpu as pltpu


# ---------------------------------------------------------------------------
# helpers
# ---------------------------------------------------------------------------
def _round_up(v, m):
    return (v + m - 1) // m * m


def _pick_tile(npad):
    # largest MXU/VMEM-friendly tile that divides the padded node count
    for t in (512, 256, 128):
        if npad % t == 0:
            return t
    return npad


def _nan_to_num(x, clip):
    # torch.nan_to_num(x, nan=0, posinf=clip, neginf=-clip)
    x = jnp.where(jnp.isnan(x), jnp.float32(0.0), x)
    x = jnp.where(x == jnp.inf, jnp.float32(clip), x)
    x = jnp.where(x == -jnp.inf, jnp.float32(-clip), x)
    return x


def _activation(h, clip_value, do_clip):
    # nan_to_num -> [clamp(-c, c)] -> relu   (clamp+relu fuse to clip(0, c))
    h = _nan_to_num(h, clip_value)
    if do_clip:
        return jnp.clip(h, 0.0, clip_value)
    return jnp.maximum(h, 0.0)


# ---------------------------------------------------------------------------
# Pallas kernels
# ---------------------------------------------------------------------------
def _fused_kernel(a_ref, x_ref, w1_ref, b1_ref, w2_ref, b2_ref, p_ref, inv_ref,
                  o_ref, *, clip_value, do_clip):
    """Whole forward in one kernel (everything VMEM-resident)."""
    a = a_ref[...]                                                       # bf16 [N,N]
    # conv1:  (A @ X) @ W1 + b1
    ax = jnp.dot(a, x_ref[...], preferred_element_type=jnp.float32)     # [N,C] f32
    h1 = jnp.dot(ax.astype(jnp.bfloat16), w1_ref[...],
                 preferred_element_type=jnp.float32) + b1_ref[...]
    h1 = _activation(h1, clip_value, do_clip)                           # [N,H] f32
    # conv2:  (A @ H1) @ W2 + b2
    ah = jnp.dot(a, h1.astype(jnp.bfloat16),
                 preferred_element_type=jnp.float32)                    # [N,H] f32
    h2 = jnp.dot(ah.astype(jnp.bfloat16), w2_ref[...],
                 preferred_element_type=jnp.float32) + b2_ref[...]
    h2 = _activation(h2, clip_value, do_clip)                           # [N,H] f32
    # global mean pool: membership @ H2 scaled by exact f32 1/count
    g = jnp.dot(p_ref[...], h2.astype(jnp.bfloat16),
                preferred_element_type=jnp.float32) * inv_ref[...]
    o_ref[...] = _nan_to_num(g, clip_value)


def _gcn_layer_kernel(a_ref, x_ref, w_ref, b_ref, o_ref, acc_ref,
                      *, clip_value, do_clip):
    """One GCNConv: relu(nan_to_num((A @ X) @ W + b)), K-tiled reduction."""
    k = pl.program_id(1)

    @pl.when(k == 0)
    def _():
        acc_ref[...] = jnp.zeros_like(acc_ref)

    # acc[rows, :] += A[rows, k_tile] @ X[k_tile, :]   (bf16 MXU, f32 accumulate)
    acc_ref[...] += jnp.dot(a_ref[...], x_ref[...],
                            preferred_element_type=jnp.float32)

    @pl.when(k == pl.num_programs(1) - 1)
    def _():
        h = jnp.dot(acc_ref[...].astype(jnp.bfloat16), w_ref[...],
                    preferred_element_type=jnp.float32) + b_ref[...]
        o_ref[...] = _activation(h, clip_value, do_clip).astype(o_ref.dtype)


def _pool_kernel(p_ref, h_ref, inv_ref, o_ref, acc_ref, *, clip_value):
    """global_mean_pool: (membership @ h) * (1/count), N-tiled reduction."""
    k = pl.program_id(0)

    @pl.when(k == 0)
    def _():
        acc_ref[...] = jnp.zeros_like(acc_ref)

    acc_ref[...] += jnp.dot(p_ref[...], h_ref[...],
                            preferred_element_type=jnp.float32)

    @pl.when(k == pl.num_programs(0) - 1)
    def _():
        g = acc_ref[...] * inv_ref[...]
        o_ref[...] = _nan_to_num(g, clip_value)


# ---------------------------------------------------------------------------
# pallas_call wrappers
# ---------------------------------------------------------------------------
_VMEM_LIMIT = 32 * 1024 * 1024      # safe on v5e/v6e/v7x (v7x: 64 MiB physical)


def _fused_forward(a_p, x_p, w1_p, b1_p, w2_p, b2_p, p_p, inv_p,
                   *, clip_value, do_clip):
    npad = a_p.shape[0]
    cpad = x_p.shape[1]
    hpad = w1_p.shape[1]
    gpad = p_p.shape[0]

    flops = int(2 * npad * npad * cpad + 2 * npad * cpad * hpad
                + 2 * npad * npad * hpad + 2 * npad * hpad * hpad
                + 2 * gpad * npad * hpad)
    bytes_accessed = int(2 * (a_p.size + x_p.size + w1_p.size + w2_p.size + p_p.size)
                         + 4 * (b1_p.size + b2_p.size + inv_p.size)
                         + 4 * gpad * hpad)

    kernel = functools.partial(_fused_kernel,
                               clip_value=clip_value, do_clip=do_clip)
    vspec = pl.BlockSpec(memory_space=pltpu.MemorySpace.VMEM)
    return pl.pallas_call(
        kernel,
        out_shape=jax.ShapeDtypeStruct((gpad, hpad), jnp.float32),
        in_specs=[vspec] * 8,
        out_specs=vspec,
        compiler_params=pltpu.CompilerParams(vmem_limit_bytes=_VMEM_LIMIT),
        cost_estimate=pl.CostEstimate(flops=flops, transcendentals=0,
                                      bytes_accessed=bytes_accessed),
    )(a_p, x_p, w1_p, b1_p, w2_p, b2_p, p_p, inv_p)


def _gcn_layer(a_bf16, x_bf16, w_bf16, b_f32, *, clip_value, do_clip, tn, tk):
    npad = a_bf16.shape[0]
    cin = x_bf16.shape[1]
    hpad = w_bf16.shape[1]
    grid = (npad // tn, npad // tk)

    flops = int(2 * npad * npad * cin + 2 * npad * cin * hpad)
    bytes_accessed = int((a_bf16.size + x_bf16.size + w_bf16.size) * 2
                         + b_f32.size * 4 + npad * hpad * 2)

    kernel = functools.partial(_gcn_layer_kernel,
                               clip_value=clip_value, do_clip=do_clip)
    return pl.pallas_call(
        kernel,
        out_shape=jax.ShapeDtypeStruct((npad, hpad), jnp.bfloat16),
        grid_spec=pltpu.PrefetchScalarGridSpec(
            num_scalar_prefetch=0,
            grid=grid,
            in_specs=[
                pl.BlockSpec((tn, tk), lambda i, k: (i, k)),     # A_hat tile
                pl.BlockSpec((tk, cin), lambda i, k: (k, 0)),    # X tile
                pl.BlockSpec((cin, hpad), lambda i, k: (0, 0)),  # W (small, resident)
                pl.BlockSpec((1, hpad), lambda i, k: (0, 0)),    # bias row
            ],
            out_specs=pl.BlockSpec((tn, hpad), lambda i, k: (i, 0)),
            scratch_shapes=[pltpu.VMEM((tn, hpad), jnp.float32)],
        ),
        compiler_params=pltpu.CompilerParams(
            dimension_semantics=("parallel", "arbitrary"),
            vmem_limit_bytes=_VMEM_LIMIT,
        ),
        cost_estimate=pl.CostEstimate(flops=flops, transcendentals=0,
                                      bytes_accessed=bytes_accessed),
    )(a_bf16, x_bf16, w_bf16, b_f32)


def _mean_pool(p_bf16, h_bf16, inv_f32, *, clip_value, tk):
    gpad, npad = p_bf16.shape
    hpad = h_bf16.shape[1]
    grid = (npad // tk,)

    kernel = functools.partial(_pool_kernel, clip_value=clip_value)
    return pl.pallas_call(
        kernel,
        out_shape=jax.ShapeDtypeStruct((gpad, hpad), jnp.float32),
        grid_spec=pltpu.PrefetchScalarGridSpec(
            num_scalar_prefetch=0,
            grid=grid,
            in_specs=[
                pl.BlockSpec((gpad, tk), lambda k: (0, k)),      # membership tile
                pl.BlockSpec((tk, hpad), lambda k: (k, 0)),      # h tile
                pl.BlockSpec((gpad, hpad), lambda k: (0, 0)),    # 1/count (f32)
            ],
            out_specs=pl.BlockSpec((gpad, hpad), lambda k: (0, 0)),
            scratch_shapes=[pltpu.VMEM((gpad, hpad), jnp.float32)],
        ),
        compiler_params=pltpu.CompilerParams(
            dimension_semantics=("arbitrary",),
            vmem_limit_bytes=_VMEM_LIMIT,
        ),
        cost_estimate=pl.CostEstimate(
            flops=int(2 * gpad * npad * hpad), transcendentals=0,
            bytes_accessed=int(p_bf16.size * 2 + h_bf16.size * 2
                               + inv_f32.size * 4 + gpad * hpad * 4)),
    )(p_bf16, h_bf16, inv_f32)


# ---------------------------------------------------------------------------
# Glue: dense normalized adjacency (GCN norm w/ self loops) + forward
# ---------------------------------------------------------------------------
def build_gcn_adjacency(edge_index, num_nodes, edge_weight=None):
    src = edge_index[0]
    dst = edge_index[1]
    if edge_weight is None:
        edge_weight = jnp.ones((src.shape[0],), dtype=jnp.float32)
    # A[dst, src] += w, plus self loops with weight 1 (PyG GCNConv default).
    a = jnp.zeros((num_nodes, num_nodes), dtype=jnp.float32)
    a = a.at[dst, src].add(edge_weight)
    a = a + jnp.eye(num_nodes, dtype=jnp.float32)
    deg = a.sum(axis=1)
    d_inv_sqrt = jnp.where(deg > 0, 1.0 / jnp.sqrt(deg), 0.0)
    return d_inv_sqrt[:, None] * a * d_inv_sqrt[None, :]


def temporal_gcn_forward(x, edge_index, w1, b1, w2, b2, *,
                         edge_weight=None, batch=None, num_graphs=1,
                         activation_clip_value=1e5, do_activation_clip=False,
                         force_tiled=False):
    """Fused TemporalGCNLayer forward on TPU via Pallas kernels."""
    n, c_in = x.shape
    hidden = w2.shape[1]
    clip_value = float(activation_clip_value)

    if batch is None:
        batch = jnp.zeros((n,), dtype=jnp.int32)
        num_graphs = 1

    # ---- dense A_hat + pooling membership (plain-JAX glue, scatter-add) ----
    a_hat = build_gcn_adjacency(edge_index, n, edge_weight)                  # [N, N]
    onehot = (batch[None, :] == jnp.arange(num_graphs)[:, None]).astype(jnp.float32)
    counts = onehot.sum(axis=1, keepdims=True)                               # [G, 1]
    inv_counts = jnp.where(counts > 0, 1.0 / counts, 0.0)                    # exact f32 mean

    # ---- zero-pad to lane/sublane-dense TPU shapes ----
    npad = _round_up(max(n, 1), 128)
    cpad = _round_up(c_in, 128)
    hpad = _round_up(hidden, 128)
    gpad = _round_up(num_graphs, 16)

    a_p = jnp.zeros((npad, npad), jnp.float32).at[:n, :n].set(a_hat).astype(jnp.bfloat16)
    x_p = jnp.zeros((npad, cpad), jnp.float32).at[:n, :c_in].set(x).astype(jnp.bfloat16)
    w1_p = jnp.zeros((cpad, hpad), jnp.float32).at[:c_in, :hidden].set(w1).astype(jnp.bfloat16)
    w2_p = jnp.zeros((hpad, hpad), jnp.float32).at[:hidden, :hidden].set(w2).astype(jnp.bfloat16)
    b1_p = jnp.zeros((1, hpad), jnp.float32).at[0, :hidden].set(b1)
    b2_p = jnp.zeros((1, hpad), jnp.float32).at[0, :hidden].set(b2)
    p_p = jnp.zeros((gpad, npad), jnp.float32).at[:num_graphs, :n].set(onehot).astype(jnp.bfloat16)
    inv_p = jnp.zeros((gpad, hpad), jnp.float32).at[:num_graphs, :].set(
        jnp.broadcast_to(inv_counts, (num_graphs, hpad)))

    # rough VMEM footprint of the fully fused kernel (operands + f32 intermediates)
    fused_bytes = (2 * (a_p.size + x_p.size + w1_p.size + w2_p.size + p_p.size)
                   + 4 * (b1_p.size + b2_p.size + inv_p.size)
                   + 4 * 4 * npad * hpad + 4 * gpad * hpad)

    if (not force_tiled) and fused_bytes <= 20 * 1024 * 1024:
        # ---- single fused kernel: conv1 -> conv2 -> mean pool, all in VMEM ----
        g = _fused_forward(a_p, x_p, w1_p, b1_p, w2_p, b2_p, p_p, inv_p,
                           clip_value=clip_value, do_clip=do_activation_clip)
    else:
        # ---- tiled fallback for large graphs ----
        tile = _pick_tile(npad)   # TODO(synk): re-derive tile plan per generation for very large N (v7x has 64 MiB VMEM)
        h1 = _gcn_layer(a_p, x_p, w1_p, b1_p, clip_value=clip_value,
                        do_clip=do_activation_clip, tn=tile, tk=tile)
        h2 = _gcn_layer(a_p, h1, w2_p, b2_p, clip_value=clip_value,
                        do_clip=do_activation_clip, tn=tile, tk=tile)
        g = _mean_pool(p_p, h2, inv_p, clip_value=clip_value, tk=tile)

    g = g[:num_graphs, :hidden]
    if num_graphs == 1:
        g = g.reshape(hidden)     # mirrors torch .squeeze(0)
    return g


def glorot(key, shape):
    fan_in, fan_out = shape
    limit = jnp.sqrt(6.0 / (fan_in + fan_out))
    return jax.random.uniform(key, shape, jnp.float32, -limit, limit)


# ---------------------------------------------------------------------------
if __name__ == "__main__":
    in_channels = 4
    hidden_channels = 32
    num_nodes = 16

    key = jax.random.PRNGKey(0)
    k_x, k_w1, k_w2 = jax.random.split(key, 3)

    # Node features [N, C_in]
    x = jax.random.normal(k_x, (num_nodes, in_channels), dtype=jnp.float32)

    # Simple bidirectional ring graph
    fwd = jnp.arange(num_nodes, dtype=jnp.int32)
    nxt = (fwd + 1) % num_nodes
    edge_index = jnp.stack([jnp.concatenate([fwd, nxt]),
                            jnp.concatenate([nxt, fwd])], axis=0)  # [2, 2N]

    # GCNConv init: glorot weight, zero bias
    w1 = glorot(k_w1, (in_channels, hidden_channels))
    b1 = jnp.zeros((hidden_channels,), dtype=jnp.float32)
    w2 = glorot(k_w2, (hidden_channels, hidden_channels))
    b2 = jnp.zeros((hidden_channels,), dtype=jnp.float32)

    # Pure-JAX f32 reference (tolerant of bf16 MXU rounding in the kernels).
    a_hat = build_gcn_adjacency(edge_index, num_nodes)
    h = jnp.maximum(_nan_to_num(a_hat @ (x @ w1) + b1, 1e5), 0.0)
    h = jnp.maximum(_nan_to_num(a_hat @ (h @ w2) + b2, 1e5), 0.0)
    ref = _nan_to_num(h.mean(axis=0), 1e5)

    # Fused (default) path
    out_fused = temporal_gcn_forward(
        x, edge_index, w1, b1, w2, b2,
        activation_clip_value=1e5, do_activation_clip=False)
    # Tiled fallback path (exercised explicitly to keep it validated)
    out_tiled = temporal_gcn_forward(
        x, edge_index, w1, b1, w2, b2,
        activation_clip_value=1e5, do_activation_clip=False, force_tiled=True)
    jax.block_until_ready((out_fused, out_tiled))

    assert out_fused.shape == (hidden_channels,)
    assert out_tiled.shape == (hidden_channels,)
    assert bool(jnp.all(jnp.isfinite(out_fused)))
    assert bool(jnp.allclose(out_fused, ref, atol=1e-1, rtol=1e-1)), \
        float(jnp.max(jnp.abs(out_fused - ref)))
    assert bool(jnp.allclose(out_tiled, ref, atol=1e-1, rtol=1e-1)), \
        float(jnp.max(jnp.abs(out_tiled - ref)))

    print("KERNEL_OK")
</pallas_src>

<mosaic_0001>
module attributes {stable_mosaic.version = 11 : i64} {
  func.func @_fused_kernel(%arg0: memref<128x128xbf16, #tpu.memory_space<vmem>>, %arg1: memref<128x128xbf16, #tpu.memory_space<vmem>>, %arg2: memref<128x128xbf16, #tpu.memory_space<vmem>>, %arg3: memref<1x128xf32, #tpu.memory_space<vmem>>, %arg4: memref<128x128xbf16, #tpu.memory_space<vmem>>, %arg5: memref<1x128xf32, #tpu.memory_space<vmem>>, %arg6: memref<16x128xbf16, #tpu.memory_space<vmem>>, %arg7: memref<16x128xf32, #tpu.memory_space<vmem>>, %arg8: memref<16x128xf32, #tpu.memory_space<vmem>>) attributes {dimension_semantics = [], scalar_prefetch = 0 : i64, scratch_operands = 0 : i64, tpu.core_type = #tpu.core_type<tc>} {
    %c0 = arith.constant 0 : index
    %c0_0 = arith.constant 0 : index
    %0 = vector.load %arg0[%c0, %c0_0] : memref<128x128xbf16, #tpu.memory_space<vmem>>, vector<128x128xbf16>
    %c0_1 = arith.constant 0 : index
    %c0_2 = arith.constant 0 : index
    %1 = vector.load %arg1[%c0_1, %c0_2] : memref<128x128xbf16, #tpu.memory_space<vmem>>, vector<128x128xbf16>
    %cst = arith.constant dense<0.000000e+00> : vector<128x128xf32>
    %2 = tpu.matmul %0, %1, %cst {dimension_numbers = #tpu.dot_dimension_numbers<[1], [0], [0], [1], [0, 0, 1, 1], [], []>} : vector<128x128xbf16>, vector<128x128xbf16>, vector<128x128xf32> -> vector<128x128xf32>
    %3 = arith.truncf %2 : vector<128x128xf32> to vector<128x128xbf16>
    %c0_3 = arith.constant 0 : index
    %c0_4 = arith.constant 0 : index
    %4 = vector.load %arg2[%c0_3, %c0_4] : memref<128x128xbf16, #tpu.memory_space<vmem>>, vector<128x128xbf16>
    %cst_5 = arith.constant dense<0.000000e+00> : vector<128x128xf32>
    %5 = tpu.matmul %3, %4, %cst_5 {dimension_numbers = #tpu.dot_dimension_numbers<[1], [0], [0], [1], [0, 0, 1, 1], [], []>} : vector<128x128xbf16>, vector<128x128xbf16>, vector<128x128xf32> -> vector<128x128xf32>
    %c0_6 = arith.constant 0 : index
    %c0_7 = arith.constant 0 : index
    %6 = vector.load %arg3[%c0_6, %c0_7] : memref<1x128xf32, #tpu.memory_space<vmem>>, vector<1x128xf32>
    %7 = vector.broadcast %6 : vector<1x128xf32> to vector<128x128xf32>
    %8 = arith.addf %5, %7 : vector<128x128xf32>
    %9 = arith.cmpf one, %8, %8 : vector<128x128xf32>
    %cst_8 = arith.constant 0.000000e+00 : f32
    %10 = vector.broadcast %cst_8 : f32 to vector<128x128xf32>
    %11 = arith.select %9, %10, %8 : vector<128x128xi1>, vector<128x128xf32>
    %cst_9 = arith.constant 0x7F800000 : f32
    %12 = vector.broadcast %cst_9 : f32 to vector<128x128xf32>
    %13 = arith.cmpf oeq, %11, %12 : vector<128x128xf32>
    %cst_10 = arith.constant 1.000000e+05 : f32
    %14 = vector.broadcast %cst_10 : f32 to vector<128x128xf32>
    %15 = arith.select %13, %14, %11 : vector<128x128xi1>, vector<128x128xf32>
    %cst_11 = arith.constant 0xFF800000 : f32
    %16 = vector.broadcast %cst_11 : f32 to vector<128x128xf32>
    %17 = arith.cmpf oeq, %15, %16 : vector<128x128xf32>
    %cst_12 = arith.constant -1.000000e+05 : f32
    %18 = vector.broadcast %cst_12 : f32 to vector<128x128xf32>
    %19 = arith.select %17, %18, %15 : vector<128x128xi1>, vector<128x128xf32>
    %cst_13 = arith.constant 0.000000e+00 : f32
    %20 = vector.broadcast %cst_13 : f32 to vector<128x128xf32>
    %21 = arith.maximumf %19, %20 : vector<128x128xf32>
    %22 = arith.truncf %21 : vector<128x128xf32> to vector<128x128xbf16>
    %cst_14 = arith.constant dense<0.000000e+00> : vector<128x128xf32>
    %23 = tpu.matmul %0, %22, %cst_14 {dimension_numbers = #tpu.dot_dimension_numbers<[1], [0], [0], [1], [0, 0, 1, 1], [], []>} : vector<128x128xbf16>, vector<128x128xbf16>, vector<128x128xf32> -> vector<128x128xf32>
    %24 = arith.truncf %23 : vector<128x128xf32> to vector<128x128xbf16>
    %c0_15 = arith.constant 0 : index
    %c0_16 = arith.constant 0 : index
    %25 = vector.load %arg4[%c0_15, %c0_16] : memref<128x128xbf16, #tpu.memory_space<vmem>>, vector<128x128xbf16>
    %cst_17 = arith.constant dense<0.000000e+00> : vector<128x128xf32>
    %26 = tpu.matmul %24, %25, %cst_17 {dimension_numbers = #tpu.dot_dimension_numbers<[1], [0], [0], [1], [0, 0, 1, 1], [], []>} : vector<128x128xbf16>, vector<128x128xbf16>, vector<128x128xf32> -> vector<128x128xf32>
    %c0_18 = arith.constant 0 : index
    %c0_19 = arith.constant 0 : index
    %27 = vector.load %arg5[%c0_18, %c0_19] : memref<1x128xf32, #tpu.memory_space<vmem>>, vector<1x128xf32>
    %28 = vector.broadcast %27 : vector<1x128xf32> to vector<128x128xf32>
    %29 = arith.addf %26, %28 : vector<128x128xf32>
    %30 = arith.cmpf one, %29, %29 : vector<128x128xf32>
    %cst_20 = arith.constant 0.000000e+00 : f32
    %31 = vector.broadcast %cst_20 : f32 to vector<128x128xf32>
    %32 = arith.select %30, %31, %29 : vector<128x128xi1>, vector<128x128xf32>
    %cst_21 = arith.constant 0x7F800000 : f32
    %33 = vector.broadcast %cst_21 : f32 to vector<128x128xf32>
    %34 = arith.cmpf oeq, %32, %33 : vector<128x128xf32>
    %cst_22 = arith.constant 1.000000e+05 : f32
    %35 = vector.broadcast %cst_22 : f32 to vector<128x128xf32>
    %36 = arith.select %34, %35, %32 : vector<128x128xi1>, vector<128x128xf32>
    %cst_23 = arith.constant 0xFF800000 : f32
    %37 = vector.broadcast %cst_23 : f32 to vector<128x128xf32>
    %38 = arith.cmpf oeq, %36, %37 : vector<128x128xf32>
    %cst_24 = arith.constant -1.000000e+05 : f32
    %39 = vector.broadcast %cst_24 : f32 to vector<128x128xf32>
    %40 = arith.select %38, %39, %36 : vector<128x128xi1>, vector<128x128xf32>
    %cst_25 = arith.constant 0.000000e+00 : f32
    %41 = vector.broadcast %cst_25 : f32 to vector<128x128xf32>
    %42 = arith.maximumf %40, %41 : vector<128x128xf32>
    %c0_26 = arith.constant 0 : index
    %c0_27 = arith.constant 0 : index
    %43 = vector.load %arg6[%c0_26, %c0_27] : memref<16x128xbf16, #tpu.memory_space<vmem>>, vector<16x128xbf16>
    %44 = arith.truncf %42 : vector<128x128xf32> to vector<128x128xbf16>
    %cst_28 = arith.constant dense<0.000000e+00> : vector<16x128xf32>
    %45 = tpu.matmul %43, %44, %cst_28 {dimension_numbers = #tpu.dot_dimension_numbers<[1], [0], [0], [1], [0, 0, 1, 1], [], []>} : vector<16x128xbf16>, vector<128x128xbf16>, vector<16x128xf32> -> vector<16x128xf32>
    %c0_29 = arith.constant 0 : index
    %c0_30 = arith.constant 0 : index
    %46 = vector.load %arg7[%c0_29, %c0_30] : memref<16x128xf32, #tpu.memory_space<vmem>>, vector<16x128xf32>
    %47 = arith.mulf %45, %46 : vector<16x128xf32>
    %48 = arith.cmpf one, %47, %47 : vector<16x128xf32>
    %cst_31 = arith.constant 0.000000e+00 : f32
    %49 = vector.broadcast %cst_31 : f32 to vector<16x128xf32>
    %50 = arith.select %48, %49, %47 : vector<16x128xi1>, vector<16x128xf32>
    %cst_32 = arith.constant 0x7F800000 : f32
    %51 = vector.broadcast %cst_32 : f32 to vector<16x128xf32>
    %52 = arith.cmpf oeq, %50, %51 : vector<16x128xf32>
    %cst_33 = arith.constant 1.000000e+05 : f32
    %53 = vector.broadcast %cst_33 : f32 to vector<16x128xf32>
    %54 = arith.select %52, %53, %50 : vector<16x128xi1>, vector<16x128xf32>
    %cst_34 = arith.constant 0xFF800000 : f32
    %55 = vector.broadcast %cst_34 : f32 to vector<16x128xf32>
    %56 = arith.cmpf oeq, %54, %55 : vector<16x128xf32>
    %cst_35 = arith.constant -1.000000e+05 : f32
    %57 = vector.broadcast %cst_35 : f32 to vector<16x128xf32>
    %58 = arith.select %56, %57, %54 : vector<16x128xi1>, vector<16x128xf32>
    %c0_36 = arith.constant 0 : index
    %c0_37 = arith.constant 0 : index
    %59 = vector.load %arg8[%c0_36, %c0_37] : memref<16x128xf32, #tpu.memory_space<vmem>>, vector<16x128xf32>
    tpu.vector_store %arg8[%c0_36, %c0_37], %58 {strides = array<i32>} : memref<16x128xf32, #tpu.memory_space<vmem>>, vector<16x128xf32>,
    return
  }
}

</mosaic_0001>

<llo_original>
// kernel: tpu_custom_call.1
$region0: #{tpu_custom_call.1}
  #allocation0 [shape = 'u32[]', space=smem, size = 0x4, offset = 0x4, fixed_abs, tag = 'smem constant byte address 0x4 - core index']
  #allocation1 [shape = 'u32[144,128]{1,0:T(1,128)}', space=vmem, size = 0x12000, scoped, tag = 'internal scratch']
  %s0 = inlined_call_operand.hbm [shape: bf16[128,128], index: 0, kind: input, shape index: {}]
  %s1 = inlined_call_operand.hbm [shape: bf16[128,128], index: 1, kind: input, shape index: {}]
  %s2 = inlined_call_operand.hbm [shape: bf16[128,128], index: 2, kind: input, shape index: {}]
  %s3 = inlined_call_operand.vmem [shape: f32[1,128], index: 3, kind: input, shape index: {}]
  %s4 = inlined_call_operand.hbm [shape: bf16[128,128], index: 4, kind: input, shape index: {}]
  %s5 = inlined_call_operand.vmem [shape: f32[1,128], index: 5, kind: input, shape index: {}]
  %s6 = inlined_call_operand.vmem [shape: bf16[16,128], index: 6, kind: input, shape index: {}]
  %s7 = inlined_call_operand.vmem [shape: f32[16,128], index: 7, kind: input, shape index: {}]
  %s8 = inlined_call_operand.hbm [shape: f32[16,128], index: 8, kind: output, shape index: {}]
  %s9 = sld [smem:[#allocation0]]
  $region58: #{tpu_custom_call.1} parent=0
    _
  %s11 = ssub.s32 1, %s9
  %s12 = scalar_select 0, %s11, %s9
  $region1: #{tpu_custom_call.1} parent=0
    #allocation2 [shape = 'u8[32768]{0}', space=vmem, size = 0x8000, scoped, tag = 'input window, operand 0, single buffered']
    #allocation3 [shape = 's32[1]{0}', space=sflag, size = 0x4, scoped, tag = 'scoped memory for tpu_custom_call.1']
    #allocation4 [shape = 's32[1]{0}', space=sflag, size = 0x4, scoped, tag = 'scoped memory for tpu_custom_call.1']
    #allocation5 [shape = 'u8[32768]{0}', space=vmem, size = 0x8000, scoped, tag = 'input window, operand 1, single buffered']
    #allocation6 [shape = 's32[1]{0}', space=sflag, size = 0x4, scoped, tag = 'scoped memory for tpu_custom_call.1']
    #allocation7 [shape = 'u8[32768]{0}', space=vmem, size = 0x8000, scoped, tag = 'input window, operand 2, single buffered']
    #allocation8 [shape = 'u8[32768]{0}', space=vmem, size = 0x8000, scoped, tag = 'input window, operand 4, single buffered']
    #allocation9 [shape = 's32[1]{0}', space=sflag, size = 0x4, scoped, tag = 'scoped memory for tpu_custom_call.1']
    #allocation10 [shape = 'u8[8192]{0}', space=vmem, size = 0x2000, scoped, tag = 'output window, operand 0, single buffered']
    %13 = vsyncpa [#allocation3], 0
    %14 = vsyncpa [#allocation6], 0
    %15 = vsyncpa [#allocation9], 0
    %16 = vsyncpa [#allocation4], 0
    // Predicated region
    $region2: #{tpu_custom_call.1} parent=1 // pred_check
      _
    $region3: #{tpu_custom_call.1} parent=1 // pred_check_branch
      %18 = sbr.rel (0) target = $region5
    $region4: #{tpu_custom_call.1} parent=1 // pred_region
      %s20 = ssub.s32 1024, 1024
      %21 = vsyncadd [#allocation3], %s20
      %s22 = sshll.u32 [#allocation2], 4
      %s23 = int_to_ptr.vmem [resolvable:$true] %s22
      %28 = dma.hbm_to_vmem [thread:$0]  %s0, 1024, %s23, [#allocation3], 64, 64, 4
    $region5: #{tpu_custom_call.1} parent=1 // pred_fallthru
      _
    // Predicated region
    $region6: #{tpu_custom_call.1} parent=1 // pred_check
      _
    $region7: #{tpu_custom_call.1} parent=1 // pred_check_branch
      %30 = sbr.rel (0) target = $region9
    $region8: #{tpu_custom_call.1} parent=1 // pred_region
      %s32 = ssub.s32 1024, 1024
      %33 = vsyncadd [#allocation6], %s32
      %s34 = sshll.u32 [#allocation5], 4
      %s35 = int_to_ptr.vmem [resolvable:$true] %s34
      %40 = dma.hbm_to_vmem [thread:$0]  %s1, 1024, %s35, [#allocation6], 64, 64, 4
    $region9: #{tpu_custom_call.1} parent=1 // pred_fallthru
      _
    // Predicated region
    $region10: #{tpu_custom_call.1} parent=1 // pred_check
      _
    $region11: #{tpu_custom_call.1} parent=1 // pred_check_branch
      %42 = sbr.rel (0) target = $region13
    $region12: #{tpu_custom_call.1} parent=1 // pred_region
      %s44 = ssub.s32 1024, 1024
      %45 = vsyncadd [#allocation6], %s44
      %s46 = sshll.u32 [#allocation7], 4
      %s47 = int_to_ptr.vmem [resolvable:$true] %s46
      %52 = dma.hbm_to_vmem [thread:$0]  %s2, 1024, %s47, [#allocation6], 64, 64, 4
    $region13: #{tpu_custom_call.1} parent=1 // pred_fallthru
      _
    // Predicated region
    $region14: #{tpu_custom_call.1} parent=1 // pred_check
      _
    $region15: #{tpu_custom_call.1} parent=1 // pred_check_branch
      %54 = sbr.rel (0) target = $region17
    $region16: #{tpu_custom_call.1} parent=1 // pred_region
      _
    $region17: #{tpu_custom_call.1} parent=1 // pred_fallthru
      _
    // Predicated region
    $region18: #{tpu_custom_call.1} parent=1 // pred_check
      _
    $region19: #{tpu_custom_call.1} parent=1 // pred_check_branch
      %56 = sbr.rel (0) target = $region21
    $region20: #{tpu_custom_call.1} parent=1 // pred_region
      %s58 = ssub.s32 1024, 1024
      %59 = vsyncadd [#allocation9], %s58
      %s60 = sshll.u32 [#allocation8], 4
      %s61 = int_to_ptr.vmem [resolvable:$true] %s60
      %66 = dma.hbm_to_vmem [thread:$0]  %s4, 1024, %s61, [#allocation9], 64, 64, 4
    $region21: #{tpu_custom_call.1} parent=1 // pred_fallthru
      _
    // Predicated region
    $region22: #{tpu_custom_call.1} parent=1 // pred_check
      _
    $region23: #{tpu_custom_call.1} parent=1 // pred_check_branch
      %68 = sbr.rel (0) target = $region25
    $region24: #{tpu_custom_call.1} parent=1 // pred_region
      _
    $region25: #{tpu_custom_call.1} parent=1 // pred_fallthru
      _
    // Predicated region
    $region26: #{tpu_custom_call.1} parent=1 // pred_check
      _
    $region27: #{tpu_custom_call.1} parent=1 // pred_check_branch
      %70 = sbr.rel (0) target = $region29
    $region28: #{tpu_custom_call.1} parent=1 // pred_region
      _
    $region29: #{tpu_custom_call.1} parent=1 // pred_fallthru
      _
    // Predicated region
    $region30: #{tpu_custom_call.1} parent=1 // pred_check
      _
    $region31: #{tpu_custom_call.1} parent=1 // pred_check_branch
      %72 = sbr.rel (0) target = $region33
    $region32: #{tpu_custom_call.1} parent=1 // pred_region
      _
    $region33: #{tpu_custom_call.1} parent=1 // pred_fallthru
      _
    // Predicated region
    $region34: #{tpu_custom_call.1} parent=1 // pred_check
      _
    $region35: #{tpu_custom_call.1} parent=1 // pred_check_branch
      %74 = sbr.rel (0) target = $region37
    $region36: #{tpu_custom_call.1} parent=1 // pred_region
      %75 = dma.done [#allocation3], 1024
    $region37: #{tpu_custom_call.1} parent=1 // pred_fallthru
      _
    // Predicated region
    $region38: #{tpu_custom_call.1} parent=1 // pred_check
      _
    $region39: #{tpu_custom_call.1} parent=1 // pred_check_branch
      %77 = sbr.rel (0) target = $region41
    $region40: #{tpu_custom_call.1} parent=1 // pred_region
      %78 = dma.done [#allocation6], 1024
    $region41: #{tpu_custom_call.1} parent=1 // pred_fallthru
      _
    // Predicated region
    $region42: #{tpu_custom_call.1} parent=1 // pred_check
      _
    $region43: #{tpu_custom_call.1} parent=1 // pred_check_branch
      %80 = sbr.rel (0) target = $region45
    $region44: #{tpu_custom_call.1} parent=1 // pred_region
      %81 = dma.done [#allocation6], 1024
    $region45: #{tpu_custom_call.1} parent=1 // pred_fallthru
      _
    // Predicated region
    $region46: #{tpu_custom_call.1} parent=1 // pred_check
      _
    $region47: #{tpu_custom_call.1} parent=1 // pred_check_branch
      %83 = sbr.rel (0) target = $region49
    $region48: #{tpu_custom_call.1} parent=1 // pred_region
      %84 = dma.done [#allocation9], 1024
    $region49: #{tpu_custom_call.1} parent=1 // pred_fallthru
      _
    %v86 = vld [vmem:[#allocation2] sm:$0xf]
    %v87 = vld [vmem:[#allocation2 + $0x4] sm:$0xf]
    %v88 = vld [vmem:[#allocation2 + $0x8] sm:$0xf]
    %v89 = vld [vmem:[#allocation2 + $0xc] sm:$0xf]
    %v90 = vld [vmem:[#allocation2 + $0x10] sm:$0xf]
    %v91 = vld [vmem:[#allocation2 + $0x14] sm:$0xf]
    %v92 = vld [vmem:[#allocation2 + $0x18] sm:$0xf]
    %v93 = vld [vmem:[#allocation2 + $0x1c] sm:$0xf]
    %v94 = vld [vmem:[#allocation2 + $0x20] sm:$0xf]
    %v95 = vld [vmem:[#allocation2 + $0x24] sm:$0xf]
    %v96 = vld [vmem:[#allocation2 + $0x28] sm:$0xf]
    %v97 = vld [vmem:[#allocation2 + $0x2c] sm:$0xf]
    %v98 = vld [vmem:[#allocation2 + $0x30] sm:$0xf]
    %v99 = vld [vmem:[#allocation2 + $0x34] sm:$0xf]
    %v100 = vld [vmem:[#allocation2 + $0x38] sm:$0xf]
    %v101 = vld [vmem:[#allocation2 + $0x3c] sm:$0xf]
    %v102 = vld [vmem:[#allocation5] sm:$0xf]
    %v103 = vld [vmem:[#allocation5 + $0x4] sm:$0xf]
    %v104 = vld [vmem:[#allocation5 + $0x8] sm:$0xf]
    %v105 = vld [vmem:[#allocation5 + $0xc] sm:$0xf]
    %v106 = vld [vmem:[#allocation5 + $0x10] sm:$0xf]
    %v107 = vld [vmem:[#allocation5 + $0x14] sm:$0xf]
    %v108 = vld [vmem:[#allocation5 + $0x18] sm:$0xf]
    %v109 = vld [vmem:[#allocation5 + $0x1c] sm:$0xf]
    %v110 = vld [vmem:[#allocation5 + $0x20] sm:$0xf]
    %v111 = vld [vmem:[#allocation5 + $0x24] sm:$0xf]
    %v112 = vld [vmem:[#allocation5 + $0x28] sm:$0xf]
    %v113 = vld [vmem:[#allocation5 + $0x2c] sm:$0xf]
    %v114 = vld [vmem:[#allocation5 + $0x30] sm:$0xf]
    %v115 = vld [vmem:[#allocation5 + $0x34] sm:$0xf]
    %v116 = vld [vmem:[#allocation5 + $0x38] sm:$0xf]
    %v117 = vld [vmem:[#allocation5 + $0x3c] sm:$0xf]
    %v134 = vunpack.c.l.b16 %v86
    %v135 = vunpack.c.l.b16 %v87
    %v136 = vunpack.c.l.b16 %v88
    %v137 = vunpack.c.l.b16 %v89
    %v138 = vunpack.c.l.b16 %v90
    %v139 = vunpack.c.l.b16 %v91
    %v140 = vunpack.c.l.b16 %v92
    %v141 = vunpack.c.l.b16 %v93
    %v142 = vunpack.c.l.b16 %v94
    %v143 = vunpack.c.l.b16 %v95
    %v144 = vunpack.c.l.b16 %v96
    %v145 = vunpack.c.l.b16 %v97
    %v146 = vunpack.c.l.b16 %v98
    %v147 = vunpack.c.l.b16 %v99
    %v148 = vunpack.c.l.b16 %v100
    %v149 = vunpack.c.l.b16 %v101
    %v150 = vpack.c.b16 %v135, %v134
    %v151 = vpack.c.b16 %v137, %v136
    %v152 = vpack.c.b16 %v139, %v138
    %v153 = vpack.c.b16 %v141, %v140
    %v154 = vpack.c.b16 %v143, %v142
    %v155 = vpack.c.b16 %v145, %v144
    %v156 = vpack.c.b16 %v147, %v146
    %v157 = vpack.c.b16 %v149, %v148
    %v182 = vunpack.c.l.b16 %v102
    %v183 = vunpack.c.l.b16 %v103
    %v184 = vunpack.c.l.b16 %v104
    %v185 = vunpack.c.l.b16 %v105
    %v186 = vunpack.c.l.b16 %v106
    %v187 = vunpack.c.l.b16 %v107
    %v188 = vunpack.c.l.b16 %v108
    %v189 = vunpack.c.l.b16 %v109
    %v190 = vunpack.c.l.b16 %v110
    %v191 = vunpack.c.l.b16 %v111
    %v192 = vunpack.c.l.b16 %v112
    %v193 = vunpack.c.l.b16 %v113
    %v194 = vunpack.c.l.b16 %v114
    %v195 = vunpack.c.l.b16 %v115
    %v196 = vunpack.c.l.b16 %v116
    %v197 = vunpack.c.l.b16 %v117
    %v198 = vpack.c.b16 %v183, %v182
    %v199 = vpack.c.b16 %v185, %v184
    %v200 = vpack.c.b16 %v187, %v186
    %v201 = vpack.c.b16 %v189, %v188
    %v202 = vpack.c.b16 %v191, %v190
    %v203 = vpack.c.b16 %v193, %v192
    %v204 = vpack.c.b16 %v195, %v194
    %v205 = vpack.c.b16 %v197, %v196
    %214 = vmatprep.subr.bf16.mxu0 0
    %215 = vmatpush1.bf16.msra.mxu0 %v198
    %216 = vmatprep.subr.bf16.mxu0 0
    %217 = vmatpush1.bf16.msra.mxu0 %v199
    %218 = vmatprep.subr.bf16.mxu0 0
    %219 = vmatpush1.bf16.msra.mxu0 %v200
    %220 = vmatprep.subr.bf16.mxu0 0
    %221 = vmatpush1.bf16.msra.mxu0 %v201
    %222 = vmatprep.subr.bf16.mxu0 0
    %223 = vmatpush1.bf16.msra.mxu0 %v202
    %224 = vmatprep.subr.bf16.mxu0 0
    %225 = vmatpush1.bf16.msra.mxu0 %v203
    %226 = vmatprep.subr.bf16.mxu0 0
    %227 = vmatpush1.bf16.msra.mxu0 %v204
    %228 = vmatprep.subr.bf16.mxu0 0
    %229 = vmatpush1.bf16.msra.mxu0 %v205
    %230 = vmatprep.subr.bf16.mxu0 0
    %231 = vmatpush1.bf16.msra.mxu0 0
    %232 = vmatprep.subr.bf16.mxu0 0
    %233 = vmatpush1.bf16.msra.mxu0 0
    %234 = vmatprep.subr.bf16.mxu0 0
    %235 = vmatpush1.bf16.msra.mxu0 0
    %236 = vmatprep.subr.bf16.mxu0 0
    %237 = vmatpush1.bf16.msra.mxu0 0
    %238 = vmatprep.subr.bf16.mxu0 0
    %239 = vmatpush1.bf16.msra.mxu0 0
    %240 = vmatprep.subr.bf16.mxu0 0
    %241 = vmatpush1.bf16.msra.mxu0 0
    %242 = vmatprep.subr.bf16.mxu0 0
    %243 = vmatpush1.bf16.msra.mxu0 0
    %244 = vmatprep.subr.bf16.mxu0 0
    %245 = vmatpush1.bf16.msra.mxu0 0
    %246 = vmatprep.mubr.bf16.mxu0 0
    %247 = vmatmul.mubr.bf16.gmra.mrb[0].mxu0 %v150
    %v248 = vpop.f32.mrb[0].mxu0
    %v249 = vadd.f32 0.0, %v248
    %v250 = vpop.f32.mrb[0].mxu0
    %v251 = vpop.f32.mrb[0].mxu0
    %v252 = vadd.f32 0.0, %v251
    %v253 = vpop.f32.mrb[0].mxu0
    %254 = vmatprep.mubr.bf16.mxu0 0
    %255 = vmatmul.mubr.bf16.gmra.mrb[0].mxu0 %v151
    %v256 = vpop.f32.mrb[0].mxu0
    %v257 = vadd.f32 0.0, %v256
    %v258 = vpop.f32.mrb[0].mxu0
    %v259 = vpop.f32.mrb[0].mxu0
    %v260 = vadd.f32 0.0, %v259
    %v261 = vpop.f32.mrb[0].mxu0
    %262 = vmatprep.mubr.bf16.mxu0 0
    %263 = vmatmul.mubr.bf16.gmra.mrb[0].mxu0 %v152
    %v264 = vpop.f32.mrb[0].mxu0
    %v265 = vadd.f32 0.0, %v264
    %v266 = vpop.f32.mrb[0].mxu0
    %v267 = vpop.f32.mrb[0].mxu0
    %v268 = vadd.f32 0.0, %v267
    %v269 = vpop.f32.mrb[0].mxu0
    %270 = vmatprep.mubr.bf16.mxu0 0
    %271 = vmatmul.mubr.bf16.gmra.mrb[0].mxu0 %v153
    %v272 = vpop.f32.mrb[0].mxu0
    %v273 = vadd.f32 0.0, %v272
    %v274 = vpop.f32.mrb[0].mxu0
    %v275 = vpop.f32.mrb[0].mxu0
    %v276 = vadd.f32 0.0, %v275
    %v277 = vpop.f32.mrb[0].mxu0
    %278 = vmatprep.mubr.bf16.mxu0 0
    %279 = vmatmul.mubr.bf16.gmra.mrb[0].mxu0 %v154
    %v280 = vpop.f32.mrb[0].mxu0
    %v281 = vadd.f32 0.0, %v280
    %v282 = vpop.f32.mrb[0].mxu0
    %v283 = vpop.f32.mrb[0].mxu0
    %v284 = vadd.f32 0.0, %v283
    %v285 = vpop.f32.mrb[0].mxu0
    %286 = vmatprep.mubr.bf16.mxu0 0
    %287 = vmatmul.mubr.bf16.gmra.mrb[0].mxu0 %v155
    %v288 = vpop.f32.mrb[0].mxu0
    %v289 = vadd.f32 0.0, %v288
    %v290 = vpop.f32.mrb[0].mxu0
    %v291 = vpop.f32.mrb[0].mxu0
    %v292 = vadd.f32 0.0, %v291
    %v293 = vpop.f32.mrb[0].mxu0
    %294 = vmatprep.mubr.bf16.mxu0 0
    %295 = vmatmul.mubr.bf16.gmra.mrb[0].mxu0 %v156
    %v296 = vpop.f32.mrb[0].mxu0
    %v297 = vadd.f32 0.0, %v296
    %v298 = vpop.f32.mrb[0].mxu0
    %v299 = vpop.f32.mrb[0].mxu0
    %v300 = vadd.f32 0.0, %v299
    %v301 = vpop.f32.mrb[0].mxu0
    %302 = vmatprep.mubr.bf16.mxu0 0
    %303 = vmatmul.mubr.bf16.gmra.mrb[0].mxu0 %v157
    %v304 = vpop.f32.mrb[0].mxu0
    %v305 = vadd.f32 0.0, %v304
    %v306 = vpop.f32.mrb[0].mxu0
    %v307 = vpop.f32.mrb[0].mxu0
    %v308 = vadd.f32 0.0, %v307
    %v309 = vpop.f32.mrb[0].mxu0
    %310 = vdwg.mxu0
    %v311 = vpack.c.bf16 %v252, %v249
    %v312 = vpack.c.bf16 %v260, %v257
    %v313 = vpack.c.bf16 %v268, %v265
    %v314 = vpack.c.bf16 %v276, %v273
    %v315 = vpack.c.bf16 %v284, %v281
    %v316 = vpack.c.bf16 %v292, %v289
    %v317 = vpack.c.bf16 %v300, %v297
    %v318 = vpack.c.bf16 %v308, %v305
    %v319 = vld [vmem:[#allocation7] sm:$0xf]
    %v320 = vld [vmem:[#allocation7 + $0x4] sm:$0xf]
    %v321 = vld [vmem:[#allocation7 + $0x8] sm:$0xf]
    %v322 = vld [vmem:[#allocation7 + $0xc] sm:$0xf]
    %v323 = vld [vmem:[#allocation7 + $0x10] sm:$0xf]
    %v324 = vld [vmem:[#allocation7 + $0x14] sm:$0xf]
    %v325 = vld [vmem:[#allocation7 + $0x18] sm:$0xf]
    %v326 = vld [vmem:[#allocation7 + $0x1c] sm:$0xf]
    %v327 = vld [vmem:[#allocation7 + $0x20] sm:$0xf]
    %v328 = vld [vmem:[#allocation7 + $0x24] sm:$0xf]
    %v329 = vld [vmem:[#allocation7 + $0x28] sm:$0xf]
    %v330 = vld [vmem:[#allocation7 + $0x2c] sm:$0xf]
    %v331 = vld [vmem:[#allocation7 + $0x30] sm:$0xf]
    %v332 = vld [vmem:[#allocation7 + $0x34] sm:$0xf]
    %v333 = vld [vmem:[#allocation7 + $0x38] sm:$0xf]
    %v334 = vld [vmem:[#allocation7 + $0x3c] sm:$0xf]
    %v335 = vld [vmem:[%s3] sm:$0x1]
    %v337 = vlaneseq
    %v338 = vshrl.u32 %v337, 7
    %v339 = vsub.s32 0, %v338
    %v340 = vrot.slane %v335, %v339
    %v358 = vunpack.c.l.b16 %v319
    %v359 = vunpack.c.l.b16 %v320
    %v360 = vunpack.c.l.b16 %v321
    %v361 = vunpack.c.l.b16 %v322
    %v362 = vunpack.c.l.b16 %v323
    %v363 = vunpack.c.l.b16 %v324
    %v364 = vunpack.c.l.b16 %v325
    %v365 = vunpack.c.l.b16 %v326
    %v366 = vunpack.c.l.b16 %v327
    %v367 = vunpack.c.l.b16 %v328
    %v368 = vunpack.c.l.b16 %v329
    %v369 = vunpack.c.l.b16 %v330
    %v370 = vunpack.c.l.b16 %v331
    %v371 = vunpack.c.l.b16 %v332
    %v372 = vunpack.c.l.b16 %v333
    %v373 = vunpack.c.l.b16 %v334
    %v374 = vpack.c.b16 %v359, %v358
    %v375 = vpack.c.b16 %v361, %v360
    %v376 = vpack.c.b16 %v363, %v362
    %v377 = vpack.c.b16 %v365, %v364
    %v378 = vpack.c.b16 %v367, %v366
    %v379 = vpack.c.b16 %v369, %v368
    %v380 = vpack.c.b16 %v371, %v370
    %v381 = vpack.c.b16 %v373, %v372
    %390 = vmatprep.subr.bf16.mxu0 0
    %391 = vmatpush1.bf16.msra.mxu0 %v374
    %392 = vmatprep.subr.bf16.mxu0 0
    %393 = vmatpush1.bf16.msra.mxu0 %v375
    %394 = vmatprep.subr.bf16.mxu0 0
    %395 = vmatpush1.bf16.msra.mxu0 %v376
    %396 = vmatprep.subr.bf16.mxu0 0
    %397 = vmatpush1.bf16.msra.mxu0 %v377
    %398 = vmatprep.subr.bf16.mxu0 0
    %399 = vmatpush1.bf16.msra.mxu0 %v378
    %400 = vmatprep.subr.bf16.mxu0 0
    %401 = vmatpush1.bf16.msra.mxu0 %v379
    %402 = vmatprep.subr.bf16.mxu0 0
    %403 = vmatpush1.bf16.msra.mxu0 %v380
    %404 = vmatprep.subr.bf16.mxu0 0
    %405 = vmatpush1.bf16.msra.mxu0 %v381
    %406 = vmatprep.subr.bf16.mxu0 0
    %407 = vmatpush1.bf16.msra.mxu0 0
    %408 = vmatprep.subr.bf16.mxu0 0
    %409 = vmatpush1.bf16.msra.mxu0 0
    %410 = vmatprep.subr.bf16.mxu0 0
    %411 = vmatpush1.bf16.msra.mxu0 0
    %412 = vmatprep.subr.bf16.mxu0 0
    %413 = vmatpush1.bf16.msra.mxu0 0
    %414 = vmatprep.subr.bf16.mxu0 0
    %415 = vmatpush1.bf16.msra.mxu0 0
    %416 = vmatprep.subr.bf16.mxu0 0
    %417 = vmatpush1.bf16.msra.mxu0 0
    %418 = vmatprep.subr.bf16.mxu0 0
    %419 = vmatpush1.bf16.msra.mxu0 0
    %420 = vmatprep.subr.bf16.mxu0 0
    %421 = vmatpush1.bf16.msra.mxu0 0
    %422 = vmatprep.mubr.bf16.mxu0 0
    %423 = vmatmul.mubr.bf16.gmra.mrb[0].mxu0 %v311
    %v424 = vpop.f32.mrb[0].mxu0
    %v425 = vadd.f32 %v340, %v424
    %v426 = vpop.f32.mrb[0].mxu0
    %v427 = vpop.f32.mrb[0].mxu0
    %v428 = vadd.f32 %v340, %v427
    %v429 = vpop.f32.mrb[0].mxu0
    %430 = vmatprep.mubr.bf16.mxu0 0
    %431 = vmatmul.mubr.bf16.gmra.mrb[0].mxu0 %v312
    %v432 = vpop.f32.mrb[0].mxu0
    %v433 = vadd.f32 %v340, %v432
    %v434 = vpop.f32.mrb[0].mxu0
    %v435 = vpop.f32.mrb[0].mxu0
    %v436 = vadd.f32 %v340, %v435
    %v437 = vpop.f32.mrb[0].mxu0
    %438 = vmatprep.mubr.bf16.mxu0 0
    %439 = vmatmul.mubr.bf16.gmra.mrb[0].mxu0 %v313
    %v440 = vpop.f32.mrb[0].mxu0
    %v441 = vadd.f32 %v340, %v440
    %v442 = vpop.f32.mrb[0].mxu0
    %v443 = vpop.f32.mrb[0].mxu0
    %v444 = vadd.f32 %v340, %v443
    %v445 = vpop.f32.mrb[0].mxu0
    %446 = vmatprep.mubr.bf16.mxu0 0
    %447 = vmatmul.mubr.bf16.gmra.mrb[0].mxu0 %v314
    %v448 = vpop.f32.mrb[0].mxu0
    %v449 = vadd.f32 %v340, %v448
    %v450 = vpop.f32.mrb[0].mxu0
    %v451 = vpop.f32.mrb[0].mxu0
    %v452 = vadd.f32 %v340, %v451
    %v453 = vpop.f32.mrb[0].mxu0
    %454 = vmatprep.mubr.bf16.mxu0 0
    %455 = vmatmul.mubr.bf16.gmra.mrb[0].mxu0 %v315
    %v456 = vpop.f32.mrb[0].mxu0
    %v457 = vadd.f32 %v340, %v456
    %v458 = vpop.f32.mrb[0].mxu0
    %v459 = vpop.f32.mrb[0].mxu0
    %v460 = vadd.f32 %v340, %v459
    %v461 = vpop.f32.mrb[0].mxu0
    %462 = vmatprep.mubr.bf16.mxu0 0
    %463 = vmatmul.mubr.bf16.gmra.mrb[0].mxu0 %v316
    %v464 = vpop.f32.mrb[0].mxu0
    %v465 = vadd.f32 %v340, %v464
    %v466 = vpop.f32.mrb[0].mxu0
    %v467 = vpop.f32.mrb[0].mxu0
    %v468 = vadd.f32 %v340, %v467
    %v469 = vpop.f32.mrb[0].mxu0
    %470 = vmatprep.mubr.bf16.mxu0 0
    %471 = vmatmul.mubr.bf16.gmra.mrb[0].mxu0 %v317
    %v472 = vpop.f32.mrb[0].mxu0
    %v473 = vadd.f32 %v340, %v472
    %v474 = vpop.f32.mrb[0].mxu0
    %v475 = vpop.f32.mrb[0].mxu0
    %v476 = vadd.f32 %v340, %v475
    %v477 = vpop.f32.mrb[0].mxu0
    %478 = vmatprep.mubr.bf16.mxu0 0
    %479 = vmatmul.mubr.bf16.gmra.mrb[0].mxu0 %v318
    %v480 = vpop.f32.mrb[0].mxu0
    %v481 = vadd.f32 %v340, %v480
    %v482 = vpop.f32.mrb[0].mxu0
    %v483 = vpop.f32.mrb[0].mxu0
    %v484 = vadd.f32 %v340, %v483
    %v485 = vpop.f32.mrb[0].mxu0
    %486 = vdwg.mxu0
    %vm487 = vcmp.ne.f32.partialorder %v425, %v425
    %vm488 = vcmp.ne.f32.partialorder %v428, %v428
    %vm489 = vcmp.ne.f32.partialorder %v433, %v433
    %vm490 = vcmp.ne.f32.partialorder %v436, %v436
    %vm491 = vcmp.ne.f32.partialorder %v441, %v441
    %vm492 = vcmp.ne.f32.partialorder %v444, %v444
    %vm493 = vcmp.ne.f32.partialorder %v449, %v449
    %vm494 = vcmp.ne.f32.partialorder %v452, %v452
    %vm495 = vcmp.ne.f32.partialorder %v457, %v457
    %vm496 = vcmp.ne.f32.partialorder %v460, %v460
    %vm497 = vcmp.ne.f32.partialorder %v465, %v465
    %vm498 = vcmp.ne.f32.partialorder %v468, %v468
    %vm499 = vcmp.ne.f32.partialorder %v473, %v473
    %vm500 = vcmp.ne.f32.partialorder %v476, %v476
    %vm501 = vcmp.ne.f32.partialorder %v481, %v481
    %vm502 = vcmp.ne.f32.partialorder %v484, %v484
    %v503 = vsel %vm487, 0.0, %v425
    %v504 = vsel %vm488, 0.0, %v428
    %v505 = vsel %vm489, 0.0, %v433
    %v506 = vsel %vm490, 0.0, %v436
    %v507 = vsel %vm491, 0.0, %v441
    %v508 = vsel %vm492, 0.0, %v444
    %v509 = vsel %vm493, 0.0, %v449
    %v510 = vsel %vm494, 0.0, %v452
    %v511 = vsel %vm495, 0.0, %v457
    %v512 = vsel %vm496, 0.0, %v460
    %v513 = vsel %vm497, 0.0, %v465
    %v514 = vsel %vm498, 0.0, %v468
    %v515 = vsel %vm499, 0.0, %v473
    %v516 = vsel %vm500, 0.0, %v476
    %v517 = vsel %vm501, 0.0, %v481
    %v518 = vsel %vm502, 0.0, %v484
    %vm519 = vcmp.eq.f32.partialorder %v503, inf
    %vm520 = vcmp.eq.f32.partialorder %v504, inf
    %vm521 = vcmp.eq.f32.partialorder %v505, inf
    %vm522 = vcmp.eq.f32.partialorder %v506, inf
    %vm523 = vcmp.eq.f32.partialorder %v507, inf
    %vm524 = vcmp.eq.f32.partialorder %v508, inf
    %vm525 = vcmp.eq.f32.partialorder %v509, inf
    %vm526 = vcmp.eq.f32.partialorder %v510, inf
    %vm527 = vcmp.eq.f32.partialorder %v511, inf
    %vm528 = vcmp.eq.f32.partialorder %v512, inf
    %vm529 = vcmp.eq.f32.partialorder %v513, inf
    %vm530 = vcmp.eq.f32.partialorder %v514, inf
    %vm531 = vcmp.eq.f32.partialorder %v515, inf
    %vm532 = vcmp.eq.f32.partialorder %v516, inf
    %vm533 = vcmp.eq.f32.partialorder %v517, inf
    %vm534 = vcmp.eq.f32.partialorder %v518, inf
    %v535 = vsel %vm519, 100000.0, %v503
    %v536 = vsel %vm520, 100000.0, %v504
    %v537 = vsel %vm521, 100000.0, %v505
    %v538 = vsel %vm522, 100000.0, %v506
    %v539 = vsel %vm523, 100000.0, %v507
    %v540 = vsel %vm524, 100000.0, %v508
    %v541 = vsel %vm525, 100000.0, %v509
    %v542 = vsel %vm526, 100000.0, %v510
    %v543 = vsel %vm527, 100000.0, %v511
    %v544 = vsel %vm528, 100000.0, %v512
    %v545 = vsel %vm529, 100000.0, %v513
    %v546 = vsel %vm530, 100000.0, %v514
    %v547 = vsel %vm531, 100000.0, %v515
    %v548 = vsel %vm532, 100000.0, %v516
    %v549 = vsel %vm533, 100000.0, %v517
    %v550 = vsel %vm534, 100000.0, %v518
    %vm551 = vcmp.eq.f32.partialorder %v535, -inf
    %vm552 = vcmp.eq.f32.partialorder %v536, -inf
    %vm553 = vcmp.eq.f32.partialorder %v537, -inf
    %vm554 = vcmp.eq.f32.partialorder %v538, -inf
    %vm555 = vcmp.eq.f32.partialorder %v539, -inf
    %vm556 = vcmp.eq.f32.partialorder %v540, -inf
    %vm557 = vcmp.eq.f32.partialorder %v541, -inf
    %vm558 = vcmp.eq.f32.partialorder %v542, -inf
    %vm559 = vcmp.eq.f32.partialorder %v543, -inf
    %vm560 = vcmp.eq.f32.partialorder %v544, -inf
    %vm561 = vcmp.eq.f32.partialorder %v545, -inf
    %vm562 = vcmp.eq.f32.partialorder %v546, -inf
    %vm563 = vcmp.eq.f32.partialorder %v547, -inf
    %vm564 = vcmp.eq.f32.partialorder %v548, -inf
    %vm565 = vcmp.eq.f32.partialorder %v549, -inf
    %vm566 = vcmp.eq.f32.partialorder %v550, -inf
    %v567 = vsel %vm551, -100000.0, %v535
    %v568 = vsel %vm552, -100000.0, %v536
    %v569 = vsel %vm553, -100000.0, %v537
    %v570 = vsel %vm554, -100000.0, %v538
    %v571 = vsel %vm555, -100000.0, %v539
    %v572 = vsel %vm556, -100000.0, %v540
    %v573 = vsel %vm557, -100000.0, %v541
    %v574 = vsel %vm558, -100000.0, %v542
    %v575 = vsel %vm559, -100000.0, %v543
    %v576 = vsel %vm560, -100000.0, %v544
    %v577 = vsel %vm561, -100000.0, %v545
    %v578 = vsel %vm562, -100000.0, %v546
    %v579 = vsel %vm563, -100000.0, %v547
    %v580 = vsel %vm564, -100000.0, %v548
    %v581 = vsel %vm565, -100000.0, %v549
    %v582 = vsel %vm566, -100000.0, %v550
    %v583 = vmax.f32 %v567, 0.0
    %v584 = vmax.f32 %v568, 0.0
    %v585 = vmax.f32 %v569, 0.0
    %v586 = vmax.f32 %v570, 0.0
    %v587 = vmax.f32 %v571, 0.0
    %v588 = vmax.f32 %v572, 0.0
    %v589 = vmax.f32 %v573, 0.0
    %v590 = vmax.f32 %v574, 0.0
    %v591 = vmax.f32 %v575, 0.0
    %v592 = vmax.f32 %v576, 0.0
    %v593 = vmax.f32 %v577, 0.0
    %v594 = vmax.f32 %v578, 0.0
    %v595 = vmax.f32 %v579, 0.0
    %v596 = vmax.f32 %v580, 0.0
    %v597 = vmax.f32 %v581, 0.0
    %v598 = vmax.f32 %v582, 0.0
    %v599 = vpack.c.bf16 %v584, %v583
    %v600 = vpack.c.bf16 %v586, %v585
    %v601 = vpack.c.bf16 %v588, %v587
    %v602 = vpack.c.bf16 %v590, %v589
    %v603 = vpack.c.bf16 %v592, %v591
    %v604 = vpack.c.bf16 %v594, %v593
    %v605 = vpack.c.bf16 %v596, %v595
    %v606 = vpack.c.bf16 %v598, %v597
    %607 = vmatprep.subr.bf16.mxu0 0
    %608 = vmatpush1.bf16.msra.mxu0 %v599
    %609 = vmatprep.subr.bf16.mxu0 0
    %610 = vmatpush1.bf16.msra.mxu0 %v600
    %611 = vmatprep.subr.bf16.mxu0 0
    %612 = vmatpush1.bf16.msra.mxu0 %v601
    %613 = vmatprep.subr.bf16.mxu0 0
    %614 = vmatpush1.bf16.msra.mxu0 %v602
    %615 = vmatprep.subr.bf16.mxu0 0
    %616 = vmatpush1.bf16.msra.mxu0 %v603
    %617 = vmatprep.subr.bf16.mxu0 0
    %618 = vmatpush1.bf16.msra.mxu0 %v604
    %619 = vmatprep.subr.bf16.mxu0 0
    %620 = vmatpush1.bf16.msra.mxu0 %v605
    %621 = vmatprep.subr.bf16.mxu0 0
    %622 = vmatpush1.bf16.msra.mxu0 %v606
    %623 = vmatprep.subr.bf16.mxu0 0
    %624 = vmatpush1.bf16.msra.mxu0 0
    %625 = vmatprep.subr.bf16.mxu0 0
    %626 = vmatpush1.bf16.msra.mxu0 0
    %627 = vmatprep.subr.bf16.mxu0 0
    %628 = vmatpush1.bf16.msra.mxu0 0
    %629 = vmatprep.subr.bf16.mxu0 0
    %630 = vmatpush1.bf16.msra.mxu0 0
    %631 = vmatprep.subr.bf16.mxu0 0
    %632 = vmatpush1.bf16.msra.mxu0 0
    %633 = vmatprep.subr.bf16.mxu0 0
    %634 = vmatpush1.bf16.msra.mxu0 0
    %635 = vmatprep.subr.bf16.mxu0 0
    %636 = vmatpush1.bf16.msra.mxu0 0
    %637 = vmatprep.subr.bf16.mxu0 0
    %638 = vmatpush1.bf16.msra.mxu0 0
    %639 = vmatprep.mubr.bf16.mxu0 0
    %640 = vmatmul.mubr.bf16.gmra.mrb[0].mxu0 %v150
    %v641 = vpop.f32.mrb[0].mxu0
    %v642 = vadd.f32 0.0, %v641
    %v643 = vpop.f32.mrb[0].mxu0
    %v644 = vpop.f32.mrb[0].mxu0
    %v645 = vadd.f32 0.0, %v644
    %v646 = vpop.f32.mrb[0].mxu0
    %647 = vmatprep.mubr.bf16.mxu0 0
    %648 = vmatmul.mubr.bf16.gmra.mrb[0].mxu0 %v151
    %v649 = vpop.f32.mrb[0].mxu0
    %v650 = vadd.f32 0.0, %v649
    %v651 = vpop.f32.mrb[0].mxu0
    %v652 = vpop.f32.mrb[0].mxu0
    %v653 = vadd.f32 0.0, %v652
    %v654 = vpop.f32.mrb[0].mxu0
    %655 = vmatprep.mubr.bf16.mxu0 0
    %656 = vmatmul.mubr.bf16.gmra.mrb[0].mxu0 %v152
    %v657 = vpop.f32.mrb[0].mxu0
    %v658 = vadd.f32 0.0, %v657
    %v659 = vpop.f32.mrb[0].mxu0
    %v660 = vpop.f32.mrb[0].mxu0
    %v661 = vadd.f32 0.0, %v660
    %v662 = vpop.f32.mrb[0].mxu0
    %663 = vmatprep.mubr.bf16.mxu0 0
    %664 = vmatmul.mubr.bf16.gmra.mrb[0].mxu0 %v153
    %v665 = vpop.f32.mrb[0].mxu0
    %v666 = vadd.f32 0.0, %v665
    %v667 = vpop.f32.mrb[0].mxu0
    %v668 = vpop.f32.mrb[0].mxu0
    %v669 = vadd.f32 0.0, %v668
    %v670 = vpop.f32.mrb[0].mxu0
    %671 = vmatprep.mubr.bf16.mxu0 0
    %672 = vmatmul.mubr.bf16.gmra.mrb[0].mxu0 %v154
    %v673 = vpop.f32.mrb[0].mxu0
    %v674 = vadd.f32 0.0, %v673
    %v675 = vpop.f32.mrb[0].mxu0
    %v676 = vpop.f32.mrb[0].mxu0
    %v677 = vadd.f32 0.0, %v676
    %v678 = vpop.f32.mrb[0].mxu0
    %679 = vmatprep.mubr.bf16.mxu0 0
    %680 = vmatmul.mubr.bf16.gmra.mrb[0].mxu0 %v155
    %v681 = vpop.f32.mrb[0].mxu0
    %v682 = vadd.f32 0.0, %v681
    %v683 = vpop.f32.mrb[0].mxu0
    %v684 = vpop.f32.mrb[0].mxu0
    %v685 = vadd.f32 0.0, %v684
    %v686 = vpop.f32.mrb[0].mxu0
    %687 = vmatprep.mubr.bf16.mxu0 0
    %688 = vmatmul.mubr.bf16.gmra.mrb[0].mxu0 %v156
    %v689 = vpop.f32.mrb[0].mxu0
    %v690 = vadd.f32 0.0, %v689
    %v691 = vpop.f32.mrb[0].mxu0
    %v692 = vpop.f32.mrb[0].mxu0
    %v693 = vadd.f32 0.0, %v692
    %v694 = vpop.f32.mrb[0].mxu0
    %695 = vmatprep.mubr.bf16.mxu0 0
    %696 = vmatmul.mubr.bf16.gmra.mrb[0].mxu0 %v157
    %v697 = vpop.f32.mrb[0].mxu0
    %v698 = vadd.f32 0.0, %v697
    %v699 = vpop.f32.mrb[0].mxu0
    %v700 = vpop.f32.mrb[0].mxu0
    %v701 = vadd.f32 0.0, %v700
    %v702 = vpop.f32.mrb[0].mxu0
    %703 = vdwg.mxu0
    %v704 = vpack.c.bf16 %v645, %v642
    %v705 = vpack.c.bf16 %v653, %v650
    %v706 = vpack.c.bf16 %v661, %v658
    %v707 = vpack.c.bf16 %v669, %v666
    %v708 = vpack.c.bf16 %v677, %v674
    %v709 = vpack.c.bf16 %v685, %v682
    %v710 = vpack.c.bf16 %v693, %v690
    %v711 = vpack.c.bf16 %v701, %v698
    %v712 = vld [vmem:[#allocation8] sm:$0xf]
    %v713 = vld [vmem:[#allocation8 + $0x4] sm:$0xf]
    %v714 = vld [vmem:[#allocation8 + $0x8] sm:$0xf]
    %v715 = vld [vmem:[#allocation8 + $0xc] sm:$0xf]
    %v716 = vld [vmem:[#allocation8 + $0x10] sm:$0xf]
    %v717 = vld [vmem:[#allocation8 + $0x14] sm:$0xf]
    %v718 = vld [vmem:[#allocation8 + $0x18] sm:$0xf]
    %v719 = vld [vmem:[#allocation8 + $0x1c] sm:$0xf]
    %v720 = vld [vmem:[#allocation8 + $0x20] sm:$0xf]
    %v721 = vld [vmem:[#allocation8 + $0x24] sm:$0xf]
    %v722 = vld [vmem:[#allocation8 + $0x28] sm:$0xf]
    %v723 = vld [vmem:[#allocation8 + $0x2c] sm:$0xf]
    %v724 = vld [vmem:[#allocation8 + $0x30] sm:$0xf]
    %v725 = vld [vmem:[#allocation8 + $0x34] sm:$0xf]
    %v726 = vld [vmem:[#allocation8 + $0x38] sm:$0xf]
    %v727 = vld [vmem:[#allocation8 + $0x3c] sm:$0xf]
    %v728 = vld [vmem:[%s5] sm:$0x1]
    %v730 = vlaneseq
    %v731 = vshrl.u32 %v730, 7
    %v732 = vsub.s32 0, %v731
    %v733 = vrot.slane %v728, %v732
    %v751 = vunpack.c.l.b16 %v712
    %v752 = vunpack.c.l.b16 %v713
    %v753 = vunpack.c.l.b16 %v714
    %v754 = vunpack.c.l.b16 %v715
    %v755 = vunpack.c.l.b16 %v716
    %v756 = vunpack.c.l.b16 %v717
    %v757 = vunpack.c.l.b16 %v718
    %v758 = vunpack.c.l.b16 %v719
    %v759 = vunpack.c.l.b16 %v720
    %v760 = vunpack.c.l.b16 %v721
    %v761 = vunpack.c.l.b16 %v722
    %v762 = vunpack.c.l.b16 %v723
    %v763 = vunpack.c.l.b16 %v724
    %v764 = vunpack.c.l.b16 %v725
    %v765 = vunpack.c.l.b16 %v726
    %v766 = vunpack.c.l.b16 %v727
    %v767 = vpack.c.b16 %v752, %v751
    %v768 = vpack.c.b16 %v754, %v753
    %v769 = vpack.c.b16 %v756, %v755
    %v770 = vpack.c.b16 %v758, %v757
    %v771 = vpack.c.b16 %v760, %v759
    %v772 = vpack.c.b16 %v762, %v761
    %v773 = vpack.c.b16 %v764, %v763
    %v774 = vpack.c.b16 %v766, %v765
    %783 = vmatprep.subr.bf16.mxu0 0
    %784 = vmatpush1.bf16.msra.mxu0 %v767
    %785 = vmatprep.subr.bf16.mxu0 0
    %786 = vmatpush1.bf16.msra.mxu0 %v768
    %787 = vmatprep.subr.bf16.mxu0 0
    %788 = vmatpush1.bf16.msra.mxu0 %v769
    %789 = vmatprep.subr.bf16.mxu0 0
    %790 = vmatpush1.bf16.msra.mxu0 %v770
    %791 = vmatprep.subr.bf16.mxu0 0
    %792 = vmatpush1.bf16.msra.mxu0 %v771
    %793 = vmatprep.subr.bf16.mxu0 0
    %794 = vmatpush1.bf16.msra.mxu0 %v772
    %795 = vmatprep.subr.bf16.mxu0 0
    %796 = vmatpush1.bf16.msra.mxu0 %v773
    %797 = vmatprep.subr.bf16.mxu0 0
    %798 = vmatpush1.bf16.msra.mxu0 %v774
    %799 = vmatprep.subr.bf16.mxu0 0
    %800 = vmatpush1.bf16.msra.mxu0 0
    %801 = vmatprep.subr.bf16.mxu0 0
    %802 = vmatpush1.bf16.msra.mxu0 0
    %803 = vmatprep.subr.bf16.mxu0 0
    %804 = vmatpush1.bf16.msra.mxu0 0
    %805 = vmatprep.subr.bf16.mxu0 0
    %806 = vmatpush1.bf16.msra.mxu0 0
    %807 = vmatprep.subr.bf16.mxu0 0
    %808 = vmatpush1.bf16.msra.mxu0 0
    %809 = vmatprep.subr.bf16.mxu0 0
    %810 = vmatpush1.bf16.msra.mxu0 0
    %811 = vmatprep.subr.bf16.mxu0 0
    %812 = vmatpush1.bf16.msra.mxu0 0
    %813 = vmatprep.subr.bf16.mxu0 0
    %814 = vmatpush1.bf16.msra.mxu0 0
    %815 = vmatprep.mubr.bf16.mxu0 0
    %816 = vmatmul.mubr.bf16.gmra.mrb[0].mxu0 %v704
    %v817 = vpop.f32.mrb[0].mxu0
    %v818 = vadd.f32 %v733, %v817
    %v819 = vpop.f32.mrb[0].mxu0
    %v820 = vpop.f32.mrb[0].mxu0
    %v821 = vadd.f32 %v733, %v820
    %v822 = vpop.f32.mrb[0].mxu0
    %823 = vmatprep.mubr.bf16.mxu0 0
    %824 = vmatmul.mubr.bf16.gmra.mrb[0].mxu0 %v705
    %v825 = vpop.f32.mrb[0].mxu0
    %v826 = vadd.f32 %v733, %v825
    %v827 = vpop.f32.mrb[0].mxu0
    %v828 = vpop.f32.mrb[0].mxu0
    %v829 = vadd.f32 %v733, %v828
    %v830 = vpop.f32.mrb[0].mxu0
    %831 = vmatprep.mubr.bf16.mxu0 0
    %832 = vmatmul.mubr.bf16.gmra.mrb[0].mxu0 %v706
    %v833 = vpop.f32.mrb[0].mxu0
    %v834 = vadd.f32 %v733, %v833
    %v835 = vpop.f32.mrb[0].mxu0
    %v836 = vpop.f32.mrb[0].mxu0
    %v837 = vadd.f32 %v733, %v836
    %v838 = vpop.f32.mrb[0].mxu0
    %839 = vmatprep.mubr.bf16.mxu0 0
    %840 = vmatmul.mubr.bf16.gmra.mrb[0].mxu0 %v707
    %v841 = vpop.f32.mrb[0].mxu0
    %v842 = vadd.f32 %v733, %v841
    %v843 = vpop.f32.mrb[0].mxu0
    %v844 = vpop.f32.mrb[0].mxu0
    %v845 = vadd.f32 %v733, %v844
    %v846 = vpop.f32.mrb[0].mxu0
    %847 = vmatprep.mubr.bf16.mxu0 0
    %848 = vmatmul.mubr.bf16.gmra.mrb[0].mxu0 %v708
    %v849 = vpop.f32.mrb[0].mxu0
    %v850 = vadd.f32 %v733, %v849
    %v851 = vpop.f32.mrb[0].mxu0
    %v852 = vpop.f32.mrb[0].mxu0
    %v853 = vadd.f32 %v733, %v852
    %v854 = vpop.f32.mrb[0].mxu0
    %855 = vmatprep.mubr.bf16.mxu0 0
    %856 = vmatmul.mubr.bf16.gmra.mrb[0].mxu0 %v709
    %v857 = vpop.f32.mrb[0].mxu0
    %v858 = vadd.f32 %v733, %v857
    %v859 = vpop.f32.mrb[0].mxu0
    %v860 = vpop.f32.mrb[0].mxu0
    %v861 = vadd.f32 %v733, %v860
    %v862 = vpop.f32.mrb[0].mxu0
    %863 = vmatprep.mubr.bf16.mxu0 0
    %864 = vmatmul.mubr.bf16.gmra.mrb[0].mxu0 %v710
    %v865 = vpop.f32.mrb[0].mxu0
    %v866 = vadd.f32 %v733, %v865
    %v867 = vpop.f32.mrb[0].mxu0
    %v868 = vpop.f32.mrb[0].mxu0
    %v869 = vadd.f32 %v733, %v868
    %v870 = vpop.f32.mrb[0].mxu0
    %871 = vmatprep.mubr.bf16.mxu0 0
    %872 = vmatmul.mubr.bf16.gmra.mrb[0].mxu0 %v711
    %v873 = vpop.f32.mrb[0].mxu0
    %v874 = vadd.f32 %v733, %v873
    %v875 = vpop.f32.mrb[0].mxu0
    %v876 = vpop.f32.mrb[0].mxu0
    %v877 = vadd.f32 %v733, %v876
    %v878 = vpop.f32.mrb[0].mxu0
    %879 = vdwg.mxu0
    %vm880 = vcmp.ne.f32.partialorder %v818, %v818
    %vm881 = vcmp.ne.f32.partialorder %v821, %v821
    %vm882 = vcmp.ne.f32.partialorder %v826, %v826
    %vm883 = vcmp.ne.f32.partialorder %v829, %v829
    %vm884 = vcmp.ne.f32.partialorder %v834, %v834
    %vm885 = vcmp.ne.f32.partialorder %v837, %v837
    %vm886 = vcmp.ne.f32.partialorder %v842, %v842
    %vm887 = vcmp.ne.f32.partialorder %v845, %v845
    %vm888 = vcmp.ne.f32.partialorder %v850, %v850
    %vm889 = vcmp.ne.f32.partialorder %v853, %v853
    %vm890 = vcmp.ne.f32.partialorder %v858, %v858
    %vm891 = vcmp.ne.f32.partialorder %v861, %v861
    %vm892 = vcmp.ne.f32.partialorder %v866, %v866
    %vm893 = vcmp.ne.f32.partialorder %v869, %v869
    %vm894 = vcmp.ne.f32.partialorder %v874, %v874
    %vm895 = vcmp.ne.f32.partialorder %v877, %v877
    %v896 = vsel %vm880, 0.0, %v818
    %v897 = vsel %vm881, 0.0, %v821
    %v898 = vsel %vm882, 0.0, %v826
    %v899 = vsel %vm883, 0.0, %v829
    %v900 = vsel %vm884, 0.0, %v834
    %v901 = vsel %vm885, 0.0, %v837
    %v902 = vsel %vm886, 0.0, %v842
    %v903 = vsel %vm887, 0.0, %v845
    %v904 = vsel %vm888, 0.0, %v850
    %v905 = vsel %vm889, 0.0, %v853
    %v906 = vsel %vm890, 0.0, %v858
    %v907 = vsel %vm891, 0.0, %v861
    %v908 = vsel %vm892, 0.0, %v866
    %v909 = vsel %vm893, 0.0, %v869
    %v910 = vsel %vm894, 0.0, %v874
    %v911 = vsel %vm895, 0.0, %v877
    %vm912 = vcmp.eq.f32.partialorder %v896, inf
    %vm913 = vcmp.eq.f32.partialorder %v897, inf
    %vm914 = vcmp.eq.f32.partialorder %v898, inf
    %vm915 = vcmp.eq.f32.partialorder %v899, inf
    %vm916 = vcmp.eq.f32.partialorder %v900, inf
    %vm917 = vcmp.eq.f32.partialorder %v901, inf
    %vm918 = vcmp.eq.f32.partialorder %v902, inf
    %vm919 = vcmp.eq.f32.partialorder %v903, inf
    %vm920 = vcmp.eq.f32.partialorder %v904, inf
    %vm921 = vcmp.eq.f32.partialorder %v905, inf
    %vm922 = vcmp.eq.f32.partialorder %v906, inf
    %vm923 = vcmp.eq.f32.partialorder %v907, inf
    %vm924 = vcmp.eq.f32.partialorder %v908, inf
    %vm925 = vcmp.eq.f32.partialorder %v909, inf
    %vm926 = vcmp.eq.f32.partialorder %v910, inf
    %vm927 = vcmp.eq.f32.partialorder %v911, inf
    %v928 = vsel %vm912, 100000.0, %v896
    %v929 = vsel %vm913, 100000.0, %v897
    %v930 = vsel %vm914, 100000.0, %v898
    %v931 = vsel %vm915, 100000.0, %v899
    %v932 = vsel %vm916, 100000.0, %v900
    %v933 = vsel %vm917, 100000.0, %v901
    %v934 = vsel %vm918, 100000.0, %v902
    %v935 = vsel %vm919, 100000.0, %v903
    %v936 = vsel %vm920, 100000.0, %v904
    %v937 = vsel %vm921, 100000.0, %v905
    %v938 = vsel %vm922, 100000.0, %v906
    %v939 = vsel %vm923, 100000.0, %v907
    %v940 = vsel %vm924, 100000.0, %v908
    %v941 = vsel %vm925, 100000.0, %v909
    %v942 = vsel %vm926, 100000.0, %v910
    %v943 = vsel %vm927, 100000.0, %v911
    %vm944 = vcmp.eq.f32.partialorder %v928, -inf
    %vm945 = vcmp.eq.f32.partialorder %v929, -inf
    %vm946 = vcmp.eq.f32.partialorder %v930, -inf
    %vm947 = vcmp.eq.f32.partialorder %v931, -inf
    %vm948 = vcmp.eq.f32.partialorder %v932, -inf
    %vm949 = vcmp.eq.f32.partialorder %v933, -inf
    %vm950 = vcmp.eq.f32.partialorder %v934, -inf
    %vm951 = vcmp.eq.f32.partialorder %v935, -inf
    %vm952 = vcmp.eq.f32.partialorder %v936, -inf
    %vm953 = vcmp.eq.f32.partialorder %v937, -inf
    %vm954 = vcmp.eq.f32.partialorder %v938, -inf
    %vm955 = vcmp.eq.f32.partialorder %v939, -inf
    %vm956 = vcmp.eq.f32.partialorder %v940, -inf
    %vm957 = vcmp.eq.f32.partialorder %v941, -inf
    %vm958 = vcmp.eq.f32.partialorder %v942, -inf
    %vm959 = vcmp.eq.f32.partialorder %v943, -inf
    %v960 = vsel %vm944, -100000.0, %v928
    %v961 = vsel %vm945, -100000.0, %v929
    %v962 = vsel %vm946, -100000.0, %v930
    %v963 = vsel %vm947, -100000.0, %v931
    %v964 = vsel %vm948, -100000.0, %v932
    %v965 = vsel %vm949, -100000.0, %v933
    %v966 = vsel %vm950, -100000.0, %v934
    %v967 = vsel %vm951, -100000.0, %v935
    %v968 = vsel %vm952, -100000.0, %v936
    %v969 = vsel %vm953, -100000.0, %v937
    %v970 = vsel %vm954, -100000.0, %v938
    %v971 = vsel %vm955, -100000.0, %v939
    %v972 = vsel %vm956, -100000.0, %v940
    %v973 = vsel %vm957, -100000.0, %v941
    %v974 = vsel %vm958, -100000.0, %v942
    %v975 = vsel %vm959, -100000.0, %v943
    %v976 = vmax.f32 %v960, 0.0
    %v977 = vmax.f32 %v961, 0.0
    %v978 = vmax.f32 %v962, 0.0
    %v979 = vmax.f32 %v963, 0.0
    %v980 = vmax.f32 %v964, 0.0
    %v981 = vmax.f32 %v965, 0.0
    %v982 = vmax.f32 %v966, 0.0
    %v983 = vmax.f32 %v967, 0.0
    %v984 = vmax.f32 %v968, 0.0
    %v985 = vmax.f32 %v969, 0.0
    %v986 = vmax.f32 %v970, 0.0
    %v987 = vmax.f32 %v971, 0.0
    %v988 = vmax.f32 %v972, 0.0
    %v989 = vmax.f32 %v973, 0.0
    %v990 = vmax.f32 %v974, 0.0
    %v991 = vmax.f32 %v975, 0.0
    %v992 = vld [vmem:[%s6] sm:$0xf]
    %v993 = vld [vmem:[%s6 + $0x4] sm:$0xf]
    %v994 = vpack.c.bf16 %v977, %v976
    %v995 = vpack.c.bf16 %v979, %v978
    %v996 = vpack.c.bf16 %v981, %v980
    %v997 = vpack.c.bf16 %v983, %v982
    %v998 = vpack.c.bf16 %v985, %v984
    %v999 = vpack.c.bf16 %v987, %v986
    %v1000 = vpack.c.bf16 %v989, %v988
    %v1001 = vpack.c.bf16 %v991, %v990
    %v1004 = vunpack.c.l.b16 %v992
    %v1005 = vunpack.c.l.b16 %v993
    %v1006 = vpack.c.b16 %v1005, %v1004
    %1008 = vmatprep.subr.bf16.mxu0 0
    %1009 = vmatpush1.bf16.msra.mxu0 %v994
    %1010 = vmatprep.subr.bf16.mxu0 0
    %1011 = vmatpush1.bf16.msra.mxu0 %v995
    %1012 = vmatprep.subr.bf16.mxu0 0
    %1013 = vmatpush1.bf16.msra.mxu0 %v996
    %1014 = vmatprep.subr.bf16.mxu0 0
    %1015 = vmatpush1.bf16.msra.mxu0 %v997
    %1016 = vmatprep.subr.bf16.mxu0 0
    %1017 = vmatpush1.bf16.msra.mxu0 %v998
    %1018 = vmatprep.subr.bf16.mxu0 0
    %1019 = vmatpush1.bf16.msra.mxu0 %v999
    %1020 = vmatprep.subr.bf16.mxu0 0
    %1021 = vmatpush1.bf16.msra.mxu0 %v1000
    %1022 = vmatprep.subr.bf16.mxu0 0
    %1023 = vmatpush1.bf16.msra.mxu0 %v1001
    %1024 = vmatprep.subr.bf16.mxu0 0
    %1025 = vmatpush1.bf16.msra.mxu0 0
    %1026 = vmatprep.subr.bf16.mxu0 0
    %1027 = vmatpush1.bf16.msra.mxu0 0
    %1028 = vmatprep.subr.bf16.mxu0 0
    %1029 = vmatpush1.bf16.msra.mxu0 0
    %1030 = vmatprep.subr.bf16.mxu0 0
    %1031 = vmatpush1.bf16.msra.mxu0 0
    %1032 = vmatprep.subr.bf16.mxu0 0
    %1033 = vmatpush1.bf16.msra.mxu0 0
    %1034 = vmatprep.subr.bf16.mxu0 0
    %1035 = vmatpush1.bf16.msra.mxu0 0
    %1036 = vmatprep.subr.bf16.mxu0 0
    %1037 = vmatpush1.bf16.msra.mxu0 0
    %1038 = vmatprep.subr.bf16.mxu0 0
    %1039 = vmatpush1.bf16.msra.mxu0 0
    %1040 = vmatprep.mubr.bf16.mxu0 0
    %1041 = vmatmul.mubr.bf16.gmra.mrb[0].mxu0 %v1006
    %v1042 = vpop.f32.mrb[0].mxu0
    %v1043 = vadd.f32 0.0, %v1042
    %v1044 = vpop.f32.mrb[0].mxu0
    %v1045 = vpop.f32.mrb[0].mxu0
    %v1046 = vadd.f32 0.0, %v1045
    %v1047 = vpop.f32.mrb[0].mxu0
    %1048 = vdwg.mxu0
    %v1049 = vld [vmem:[%s7] sm:$0xff]
    %v1050 = vld [vmem:[%s7 + $0x8] sm:$0xff]
    %v1051 = vmul.f32 %v1043, %v1049
    %v1052 = vmul.f32 %v1046, %v1050
    %vm1053 = vcmp.ne.f32.partialorder %v1051, %v1051
    %vm1054 = vcmp.ne.f32.partialorder %v1052, %v1052
    %v1055 = vsel %vm1053, 0.0, %v1051
    %v1056 = vsel %vm1054, 0.0, %v1052
    %vm1057 = vcmp.eq.f32.partialorder %v1055, inf
    %vm1058 = vcmp.eq.f32.partialorder %v1056, inf
    %v1059 = vsel %vm1057, 100000.0, %v1055
    %v1060 = vsel %vm1058, 100000.0, %v1056
    %vm1061 = vcmp.eq.f32.partialorder %v1059, -inf
    %vm1062 = vcmp.eq.f32.partialorder %v1060, -inf
    %v1063 = vsel %vm1061, -100000.0, %v1059
    %v1064 = vsel %vm1062, -100000.0, %v1060
    %1065 = vst [vmem:[#allocation10] sm:$0xff] %v1063
    %1066 = vst [vmem:[#allocation10 + $0x8] sm:$0xff] %v1064
    // Predicated region
    $region50: #{tpu_custom_call.1} parent=1 // pred_check
      _
    $region51: #{tpu_custom_call.1} parent=1 // pred_check_branch
      %1068 = sbr.rel (0) target = $region53
    $region52: #{tpu_custom_call.1} parent=1 // pred_region
      %s1070 = ssub.s32 256, 256
      %1071 = vsyncadd [#allocation4], %s1070
      %s1072 = sshll.u32 [#allocation10], 4
      %s1073 = int_to_ptr.vmem [resolvable:$true] %s1072
      %1078 = dma.vmem_to_hbm [thread:$0]  %s1073, 256, %s8, [#allocation4], 128, 128, 8
    $region53: #{tpu_custom_call.1} parent=1 // pred_fallthru
      _
    // Predicated region
    $region54: #{tpu_custom_call.1} parent=1 // pred_check
      _
    $region55: #{tpu_custom_call.1} parent=1 // pred_check_branch
      %1080 = sbr.rel (0) target = $region57
    $region56: #{tpu_custom_call.1} parent=1 // pred_region
      %1081 = dma.done [#allocation4], 256
    $region57: #{tpu_custom_call.1} parent=1 // pred_fallthru
      _
    %1082 = vsyncpa [#allocation3], 1
    %1083 = vsyncpa [#allocation6], 1
    %1084 = vsyncpa [#allocation9], 1
    %1085 = vsyncpa [#allocation4], 1

</llo_original>
